<compile_context>
chip_gen: v5e
topology: v5e:2x2
jax: 0.10.0
libtpu: 0.0.40
codegen_flags: <defaults>
</compile_context>

<pallas_src>
import math
import functools

import numpy as np
import jax
import jax.numpy as jnp
from jax import lax
from jax.experimental import pallas as pl
from jax.experimental.pallas import tpu as pltpu

BN_EPS = 1e-5


# ---------------------------------------------------------------------------
# Fused kernel: expand(1x1)+BN+ReLU6 -> dw3x3 -> AvgPool -> BN+ReLU6
#               -> project(1x1)+BN (+ residual)
# One grid step handles `th` output rows of one image, hidden stays in VMEM.
# ---------------------------------------------------------------------------
def _fused_kernel(*refs, expand, stride2, residual, W, Wp, th, Mq, mxu_dtype):
    it = iter(refs)
    x_ref = next(it)                       # (1, 1, Cin, Mp)   mxu_dtype
    if expand:
        w1_ref = next(it)                  # (Ch, Cin)         mxu_dtype
        b1_ref = next(it)                  # (Ch, 1)           f32
        m_ref = next(it)                   # (1, 1, Mp)        f32 border mask
    wdw_ref = next(it)                     # (Ch, 9)           f32
    b2_ref = next(it)                      # (Ch, 1)           f32
    w2_ref = next(it)                      # (Co, Ch)          mxu_dtype
    b3_ref = next(it)                      # (Co, 1)           f32
    if stride2:
        p_ref = next(it)                   # (Mq, Mo)          mxu_dtype
    if residual:
        r_ref = next(it)                   # (1, Co, th*W)     f32
    o_ref = next(it)                       # (1, Co, blk)      f32

    xs = x_ref[0, 0]                                        # (Cin, Mp)

    # ---- 1x1 expand + BN1 (scale folded) + ReLU6 -------------------------
    if expand:
        h = jnp.dot(w1_ref[...], xs, preferred_element_type=jnp.float32)
        h = jnp.clip(h + b1_ref[...], 0.0, 6.0)
        # zero the image-border halo so the depthwise sees exact zero padding
        h = h * m_ref[0]                                    # (Ch, Mp) f32
    else:
        h = xs.astype(jnp.float32)                          # pads already zero

    # ---- depthwise 3x3 (stride 1) on the row-major flat slab -------------
    # flat index p = r*Wp + c over the (th+2, W+2) padded window; taps are
    # static lane-offset slices, weights are per-channel (BN2 scale folded).
    wdw = wdw_ref[...]                                      # (Ch, 9)
    acc = jnp.zeros((h.shape[0], Mq), jnp.float32)
    for ky in range(3):
        for kx in range(3):
            t = ky * 3 + kx
            d = ky * Wp + kx
            acc = acc + h[:, d:d + Mq] * wdw[:, t:t + 1]

    # ---- AvgPool(stride) ---------------------------------------------------
    if stride2:   # 2x2 mean pool as a constant-matrix matmul (also compacts)
        acc = jnp.dot(acc.astype(mxu_dtype), p_ref[...],
                      preferred_element_type=jnp.float32)   # (Ch, Mo)

    # ---- BN2 bias + ReLU6, 1x1 project + BN3 ------------------------------
    a = jnp.clip(acc + b2_ref[...], 0.0, 6.0)
    out = jnp.dot(w2_ref[...], a.astype(mxu_dtype),
                  preferred_element_type=jnp.float32) + b3_ref[...]

    if not stride2:
        # drop the 2 pad columns per row -> lane-dense (Co, th*W) block
        out = jnp.concatenate(
            [out[:, y * Wp:y * Wp + W] for y in range(th)], axis=1)

    if residual:
        out = out + r_ref[0]

    o_ref[0] = out.astype(o_ref.dtype)


# ---------------------------------------------------------------------------
# Small host-side constant builders
# ---------------------------------------------------------------------------
def _pick_th(H, W, stride):
    """Row-tile: smallest t in {8,16,32} dividing H whose flat output block
    width is a multiple of 128 (lane-dense stores); else whole image."""
    Wo = W // stride
    for t in (8, 16, 32):
        if t <= H and H % t == 0 and ((t // stride) * Wo) % 128 == 0:
            return t
    return H


def _border_mask(n_rb, th, W):
    """1 at real data, 0 at image-border halo positions of the padded slab."""
    Wp = W + 2
    m = np.ones((n_rb, th + 2, Wp), np.float32)
    m[:, :, 0] = 0.0
    m[:, :, W + 1] = 0.0
    m[0, 0, :] = 0.0
    m[n_rb - 1, th + 1, :] = 0.0
    return jnp.asarray(m.reshape(n_rb, 1, (th + 2) * Wp))


def _pool_matrix(th, W, dtype):
    """Constant (Mq, Mo) matrix implementing 2x2 average pooling on the MXU."""
    Wp, Wo = W + 2, W // 2
    Mq = th * Wp - 2
    Mo = (th // 2) * Wo
    P = np.zeros((Mq, Mo), np.float32)
    for yy in range(th // 2):
        for xo in range(Wo):
            o = yy * Wo + xo
            for dy in (0, 1):
                for dx in (0, 1):
                    P[(2 * yy + dy) * Wp + 2 * xo + dx, o] = 0.25
    return jnp.asarray(P, dtype=dtype)


# ---------------------------------------------------------------------------
# Module wrapper (parameter setup + layout prep in plain JAX)
# ---------------------------------------------------------------------------
class InvertedResidualPallas:
    def __init__(self, inp, oup, stride, expand_ratio, key,
                 matmul_dtype=jnp.bfloat16):
        assert stride in (1, 2)
        self.inp, self.oup, self.stride = inp, oup, stride
        self.expand_ratio = expand_ratio
        self.expand = expand_ratio != 1
        hidden_dim = int(round(inp * expand_ratio))
        self.hidden_dim = hidden_dim
        self.use_res_connect = (stride == 1 and inp == oup)
        self.matmul_dtype = matmul_dtype

        k1, k2, k3 = jax.random.split(key, 3)

        def uniform_init(k, shape, n):
            s = math.sqrt(2.0 / n) * math.sqrt(3.0)
            return jax.random.uniform(k, shape, jnp.float32, -s, s)

        # raw weights, torch orientation (used by the pure-JAX reference)
        self.w_expand = (uniform_init(k1, (hidden_dim, inp), inp)
                         if self.expand else None)               # (Ch, Cin)
        self.w_dw = uniform_init(k2, (hidden_dim, 3, 3), 9)      # (Ch, 3, 3)
        self.w_project = uniform_init(k3, (oup, hidden_dim), hidden_dim)

        def bn_affine(c):  # eval-mode BN with fresh-init params
            scale = jnp.full((c,), 1.0 / math.sqrt(1.0 + BN_EPS), jnp.float32)
            bias = jnp.zeros((c,), jnp.float32)
            return scale, bias

        self.bn1 = bn_affine(hidden_dim)
        self.bn2 = bn_affine(hidden_dim)
        self.bn3 = bn_affine(oup)

        # fold BN scales into conv weights; only bias adds remain in-kernel
        s1, c1 = self.bn1
        s2, c2 = self.bn2
        s3, c3 = self.bn3
        if self.expand:
            self.w1_fold = self.w_expand * s1[:, None]            # (Ch, Cin)
        self.b1 = c1.reshape(hidden_dim, 1)
        self.wdw_fold = (self.w_dw * s2[:, None, None]).reshape(hidden_dim, 9)
        self.b2 = c2.reshape(hidden_dim, 1)
        self.w2_fold = self.w_project * s3[:, None]               # (Co, Ch)
        self.b3 = c3.reshape(oup, 1)

    def __call__(self, x):
        N, C, H, W = x.shape
        assert C == self.inp
        stride = self.stride
        if stride == 2:
            assert H % 2 == 0 and W % 2 == 0
        Ho, Wo = H // stride, W // stride
        th = _pick_th(H, W, stride)
        n_rb = H // th
        Wp = W + 2
        Mp = (th + 2) * Wp          # flat padded window length
        Mq = th * Wp - 2            # flat dw-output length (incl. pad cols)
        blk_o = (th // stride) * Wo
        Ch, Co = self.hidden_dim, self.oup
        mdt = self.matmul_dtype

        # halo window gather over the small input only (pad + gather fuse)
        xpf = jnp.pad(x, ((0, 0), (0, 0), (1, 1), (1, 1)))
        xpf = xpf.reshape(N, C, (H + 2) * Wp)
        wins = jnp.stack(
            [xpf[:, :, rb * th * Wp:(rb * th + th + 2) * Wp]
             for rb in range(n_rb)], axis=1).astype(mdt)   # (N, n_rb, C, Mp)

        args = [wins]
        in_specs = [pl.BlockSpec((1, 1, C, Mp), lambda n, rb: (n, rb, 0, 0))]

        if self.expand:
            args += [self.w1_fold.astype(mdt), self.b1,
                     _border_mask(n_rb, th, W)]
            in_specs += [
                pl.BlockSpec((Ch, C), lambda n, rb: (0, 0)),
                pl.BlockSpec((Ch, 1), lambda n, rb: (0, 0)),
                pl.BlockSpec((1, 1, Mp), lambda n, rb: (rb, 0, 0)),
            ]
        args += [self.wdw_fold, self.b2, self.w2_fold.astype(mdt), self.b3]
        in_specs += [
            pl.BlockSpec((Ch, 9), lambda n, rb: (0, 0)),
            pl.BlockSpec((Ch, 1), lambda n, rb: (0, 0)),
            pl.BlockSpec((Co, Ch), lambda n, rb: (0, 0)),
            pl.BlockSpec((Co, 1), lambda n, rb: (0, 0)),
        ]
        if stride == 2:
            args.append(_pool_matrix(th, W, mdt))
            in_specs.append(
                pl.BlockSpec((Mq, (th // 2) * Wo), lambda n, rb: (0, 0)))
        if self.use_res_connect:
            args.append(x.reshape(N, C, H * W))
            in_specs.append(
                pl.BlockSpec((1, C, th * W), lambda n, rb: (n, 0, rb)))

        kern = functools.partial(
            _fused_kernel, expand=self.expand, stride2=(stride == 2),
            residual=self.use_res_connect, W=W, Wp=Wp, th=th, Mq=Mq,
            mxu_dtype=mdt)

        out = pl.pallas_call(
            kern,
            out_shape=jax.ShapeDtypeStruct((N, Co, Ho * Wo), jnp.float32),
            grid=(N, n_rb),
            in_specs=in_specs,
            out_specs=pl.BlockSpec((1, Co, blk_o), lambda n, rb: (n, 0, rb)),
            compiler_params=pltpu.CompilerParams(
                dimension_semantics=("parallel", "parallel"),
                vmem_limit_bytes=32 * 1024 * 1024),
        )(*args)
        return out.reshape(N, Co, Ho, Wo)


# ---------------------------------------------------------------------------
# Pure-JAX reference (independent path, for correctness checks)
# ---------------------------------------------------------------------------
def reference_forward(mod, x_nchw):
    def bn(v, sb):
        scale, bias = sb
        return v * scale.reshape(1, -1, 1, 1) + bias.reshape(1, -1, 1, 1)

    h = x_nchw
    if mod.expand:
        w1 = mod.w_expand[:, :, None, None]
        h = lax.conv_general_dilated(h, w1, (1, 1), 'VALID',
                                     dimension_numbers=('NCHW', 'OIHW', 'NCHW'))
        h = jnp.clip(bn(h, mod.bn1), 0.0, 6.0)
    wdw = mod.w_dw[:, None, :, :]
    h = lax.conv_general_dilated(h, wdw, (1, 1), ((1, 1), (1, 1)),
                                 dimension_numbers=('NCHW', 'OIHW', 'NCHW'),
                                 feature_group_count=mod.hidden_dim)
    if mod.stride == 2:
        n, c, hh, ww = h.shape
        h = h.reshape(n, c, hh // 2, 2, ww // 2, 2).mean(axis=(3, 5))
    h = jnp.clip(bn(h, mod.bn2), 0.0, 6.0)
    w2 = mod.w_project[:, :, None, None]
    h = lax.conv_general_dilated(h, w2, (1, 1), 'VALID',
                                 dimension_numbers=('NCHW', 'OIHW', 'NCHW'))
    h = bn(h, mod.bn3)
    if mod.use_res_connect:
        h = x_nchw + h
    return h


if __name__ == "__main__":
    key = jax.random.PRNGKey(0)
    kx1, kx2, kp1, kp2 = jax.random.split(key, 4)

    # Config 1: expand_ratio=6, stride=1, residual path (inp == oup).
    N, inp, oup, H, W = 2, 4, 4, 16, 16
    x1 = jax.random.normal(kx1, (N, inp, H, W), jnp.float32)

    # exact check with f32 MXU operands
    blk_f32 = InvertedResidualPallas(inp, oup, 1, 6, kp1,
                                     matmul_dtype=jnp.float32)
    out_f32 = jax.block_until_ready(blk_f32(x1))
    ref1 = reference_forward(blk_f32, x1)
    assert out_f32.shape == (N, oup, H, W)
    err1 = float(jnp.max(jnp.abs(out_f32 - ref1)))
    assert jnp.allclose(out_f32, ref1, rtol=1e-4, atol=1e-4), f"f32 err {err1}"

    # default perf configuration: bf16 MXU operands, f32 accumulate/epilogue
    blk_bf16 = InvertedResidualPallas(inp, oup, 1, 6, kp1)   # same weights
    out_bf16 = jax.block_until_ready(blk_bf16(x1))
    err2 = float(jnp.max(jnp.abs(out_bf16 - ref1)))
    assert jnp.allclose(out_bf16, ref1, rtol=1e-1, atol=1e-1), f"bf16 err {err2}"

    # Config 2: expand_ratio=1, stride=2 (AvgPool path), no residual.
    inp2, oup2 = 8, 16
    x2 = jax.random.normal(kx2, (N, inp2, H, W), jnp.float32)
    blk2 = InvertedResidualPallas(inp2, oup2, 2, 1, kp2,
                                  matmul_dtype=jnp.float32)
    out2 = jax.block_until_ready(blk2(x2))
    ref2 = reference_forward(blk2, x2)
    assert out2.shape == (N, oup2, H // 2, W // 2)
    err3 = float(jnp.max(jnp.abs(out2 - ref2)))
    assert jnp.allclose(out2, ref2, rtol=1e-4, atol=1e-4), f"stride2 err {err3}"

    print("KERNEL_OK")
</pallas_src>

<mosaic_0001>
module attributes {stable_mosaic.version = 11 : i64} {
  func.func @_fused_kernel(%arg0: i32, %arg1: i32, %arg2: memref<1x1x4x180xf32, #tpu.memory_space<vmem>>, %arg3: memref<24x4xf32, #tpu.memory_space<vmem>>, %arg4: memref<24x1xf32, #tpu.memory_space<vmem>>, %arg5: memref<1x1x180xf32, #tpu.memory_space<vmem>>, %arg6: memref<24x9xf32, #tpu.memory_space<vmem>>, %arg7: memref<24x1xf32, #tpu.memory_space<vmem>>, %arg8: memref<4x24xf32, #tpu.memory_space<vmem>>, %arg9: memref<4x1xf32, #tpu.memory_space<vmem>>, %arg10: memref<1x4x128xf32, #tpu.memory_space<vmem>>, %arg11: memref<1x4x128xf32, #tpu.memory_space<vmem>>) attributes {dimension_semantics = [#tpu.dimension_semantics<parallel>, #tpu.dimension_semantics<parallel>], iteration_bounds = array<i64: 2, 2>, scalar_prefetch = 0 : i64, scratch_operands = 0 : i64, tpu.core_type = #tpu.core_type<tc>, window_params = [{transform_indices = @transform_0, window_bounds = array<i64: 1, 1, 4, 180>}, {pipeline_mode = #tpu.pipeline_mode<synchronous>, transform_indices = @transform_1, window_bounds = array<i64: 24, 4>}, {pipeline_mode = #tpu.pipeline_mode<synchronous>, transform_indices = @transform_2, window_bounds = array<i64: 24, 1>}, {transform_indices = @transform_3, window_bounds = array<i64: 1, 1, 180>}, {pipeline_mode = #tpu.pipeline_mode<synchronous>, transform_indices = @transform_4, window_bounds = array<i64: 24, 9>}, {pipeline_mode = #tpu.pipeline_mode<synchronous>, transform_indices = @transform_5, window_bounds = array<i64: 24, 1>}, {pipeline_mode = #tpu.pipeline_mode<synchronous>, transform_indices = @transform_6, window_bounds = array<i64: 4, 24>}, {pipeline_mode = #tpu.pipeline_mode<synchronous>, transform_indices = @transform_7, window_bounds = array<i64: 4, 1>}, {transform_indices = @transform_8, window_bounds = array<i64: 1, 4, 128>}, {transform_indices = @transform_9, window_bounds = array<i64: 1, 4, 128>}]} {
    %c0 = arith.constant 0 : index
    %c0_0 = arith.constant 0 : index
    %c0_1 = arith.constant 0 : index
    %c0_2 = arith.constant 0 : index
    %0 = vector.load %arg2[%c0, %c0_0, %c0_1, %c0_2] : memref<1x1x4x180xf32, #tpu.memory_space<vmem>>, vector<1x1x4x180xf32>
    %1 = vector.shape_cast %0 : vector<1x1x4x180xf32> to vector<4x180xf32>
    %c0_3 = arith.constant 0 : index
    %c0_4 = arith.constant 0 : index
    %2 = vector.load %arg3[%c0_3, %c0_4] : memref<24x4xf32, #tpu.memory_space<vmem>>, vector<24x4xf32>
    %cst = arith.constant dense<0.000000e+00> : vector<24x180xf32>
    %3 = tpu.matmul %2, %1, %cst {dimension_numbers = #tpu.dot_dimension_numbers<[1], [0], [0], [1], [0, 0, 1, 1], [], []>} : vector<24x4xf32>, vector<4x180xf32>, vector<24x180xf32> -> vector<24x180xf32>
    %c0_5 = arith.constant 0 : index
    %c0_6 = arith.constant 0 : index
    %4 = vector.load %arg4[%c0_5, %c0_6] : memref<24x1xf32, #tpu.memory_space<vmem>>, vector<24x1xf32>
    %5 = vector.broadcast %4 : vector<24x1xf32> to vector<24x180xf32>
    %6 = arith.addf %3, %5 : vector<24x180xf32>
    %cst_7 = arith.constant 0.000000e+00 : f32
    %cst_8 = arith.constant 6.000000e+00 : f32
    %7 = vector.broadcast %cst_7 : f32 to vector<24x180xf32>
    %8 = arith.maximumf %7, %6 : vector<24x180xf32>
    %9 = vector.broadcast %cst_8 : f32 to vector<24x180xf32>
    %10 = arith.minimumf %9, %8 : vector<24x180xf32>
    %c0_9 = arith.constant 0 : index
    %c0_10 = arith.constant 0 : index
    %c0_11 = arith.constant 0 : index
    %11 = vector.load %arg5[%c0_9, %c0_10, %c0_11] : memref<1x1x180xf32, #tpu.memory_space<vmem>>, vector<1x1x180xf32>
    %12 = vector.shape_cast %11 : vector<1x1x180xf32> to vector<1x180xf32>
    %13 = vector.broadcast %12 : vector<1x180xf32> to vector<24x180xf32>
    %14 = arith.mulf %10, %13 : vector<24x180xf32>
    %c0_12 = arith.constant 0 : index
    %c0_13 = arith.constant 0 : index
    %15 = vector.load %arg6[%c0_12, %c0_13] : memref<24x9xf32, #tpu.memory_space<vmem>>, vector<24x9xf32>
    %cst_14 = arith.constant 0.000000e+00 : f32
    %16 = vector.broadcast %cst_14 : f32 to vector<24x142xf32>
    %17 = vector.extract_strided_slice %14 {offsets = [0, 0], sizes = [24, 142], strides = [1, 1]} : vector<24x180xf32> to vector<24x142xf32>
    %18 = vector.extract_strided_slice %15 {offsets = [0, 0], sizes = [24, 1], strides = [1, 1]} : vector<24x9xf32> to vector<24x1xf32>
    %19 = vector.broadcast %18 : vector<24x1xf32> to vector<24x142xf32>
    %20 = arith.mulf %17, %19 : vector<24x142xf32>
    %21 = arith.addf %16, %20 : vector<24x142xf32>
    %22 = vector.extract_strided_slice %14 {offsets = [0, 1], sizes = [24, 142], strides = [1, 1]} : vector<24x180xf32> to vector<24x142xf32>
    %23 = vector.extract_strided_slice %15 {offsets = [0, 1], sizes = [24, 1], strides = [1, 1]} : vector<24x9xf32> to vector<24x1xf32>
    %24 = vector.broadcast %23 : vector<24x1xf32> to vector<24x142xf32>
    %25 = arith.mulf %22, %24 : vector<24x142xf32>
    %26 = arith.addf %21, %25 : vector<24x142xf32>
    %27 = vector.extract_strided_slice %14 {offsets = [0, 2], sizes = [24, 142], strides = [1, 1]} : vector<24x180xf32> to vector<24x142xf32>
    %28 = vector.extract_strided_slice %15 {offsets = [0, 2], sizes = [24, 1], strides = [1, 1]} : vector<24x9xf32> to vector<24x1xf32>
    %29 = vector.broadcast %28 : vector<24x1xf32> to vector<24x142xf32>
    %30 = arith.mulf %27, %29 : vector<24x142xf32>
    %31 = arith.addf %26, %30 : vector<24x142xf32>
    %32 = vector.extract_strided_slice %14 {offsets = [0, 18], sizes = [24, 142], strides = [1, 1]} : vector<24x180xf32> to vector<24x142xf32>
    %33 = vector.extract_strided_slice %15 {offsets = [0, 3], sizes = [24, 1], strides = [1, 1]} : vector<24x9xf32> to vector<24x1xf32>
    %34 = vector.broadcast %33 : vector<24x1xf32> to vector<24x142xf32>
    %35 = arith.mulf %32, %34 : vector<24x142xf32>
    %36 = arith.addf %31, %35 : vector<24x142xf32>
    %37 = vector.extract_strided_slice %14 {offsets = [0, 19], sizes = [24, 142], strides = [1, 1]} : vector<24x180xf32> to vector<24x142xf32>
    %38 = vector.extract_strided_slice %15 {offsets = [0, 4], sizes = [24, 1], strides = [1, 1]} : vector<24x9xf32> to vector<24x1xf32>
    %39 = vector.broadcast %38 : vector<24x1xf32> to vector<24x142xf32>
    %40 = arith.mulf %37, %39 : vector<24x142xf32>
    %41 = arith.addf %36, %40 : vector<24x142xf32>
    %42 = vector.extract_strided_slice %14 {offsets = [0, 20], sizes = [24, 142], strides = [1, 1]} : vector<24x180xf32> to vector<24x142xf32>
    %43 = vector.extract_strided_slice %15 {offsets = [0, 5], sizes = [24, 1], strides = [1, 1]} : vector<24x9xf32> to vector<24x1xf32>
    %44 = vector.broadcast %43 : vector<24x1xf32> to vector<24x142xf32>
    %45 = arith.mulf %42, %44 : vector<24x142xf32>
    %46 = arith.addf %41, %45 : vector<24x142xf32>
    %47 = vector.extract_strided_slice %14 {offsets = [0, 36], sizes = [24, 142], strides = [1, 1]} : vector<24x180xf32> to vector<24x142xf32>
    %48 = vector.extract_strided_slice %15 {offsets = [0, 6], sizes = [24, 1], strides = [1, 1]} : vector<24x9xf32> to vector<24x1xf32>
    %49 = vector.broadcast %48 : vector<24x1xf32> to vector<24x142xf32>
    %50 = arith.mulf %47, %49 : vector<24x142xf32>
    %51 = arith.addf %46, %50 : vector<24x142xf32>
    %52 = vector.extract_strided_slice %14 {offsets = [0, 37], sizes = [24, 142], strides = [1, 1]} : vector<24x180xf32> to vector<24x142xf32>
    %53 = vector.extract_strided_slice %15 {offsets = [0, 7], sizes = [24, 1], strides = [1, 1]} : vector<24x9xf32> to vector<24x1xf32>
    %54 = vector.broadcast %53 : vector<24x1xf32> to vector<24x142xf32>
    %55 = arith.mulf %52, %54 : vector<24x142xf32>
    %56 = arith.addf %51, %55 : vector<24x142xf32>
    %57 = vector.extract_strided_slice %14 {offsets = [0, 38], sizes = [24, 142], strides = [1, 1]} : vector<24x180xf32> to vector<24x142xf32>
    %58 = vector.extract_strided_slice %15 {offsets = [0, 8], sizes = [24, 1], strides = [1, 1]} : vector<24x9xf32> to vector<24x1xf32>
    %59 = vector.broadcast %58 : vector<24x1xf32> to vector<24x142xf32>
    %60 = arith.mulf %57, %59 : vector<24x142xf32>
    %61 = arith.addf %56, %60 : vector<24x142xf32>
    %c0_15 = arith.constant 0 : index
    %c0_16 = arith.constant 0 : index
    %62 = vector.load %arg7[%c0_15, %c0_16] : memref<24x1xf32, #tpu.memory_space<vmem>>, vector<24x1xf32>
    %63 = vector.broadcast %62 : vector<24x1xf32> to vector<24x142xf32>
    %64 = arith.addf %61, %63 : vector<24x142xf32>
    %cst_17 = arith.constant 0.000000e+00 : f32
    %cst_18 = arith.constant 6.000000e+00 : f32
    %65 = vector.broadcast %cst_17 : f32 to vector<24x142xf32>
    %66 = arith.maximumf %65, %64 : vector<24x142xf32>
    %67 = vector.broadcast %cst_18 : f32 to vector<24x142xf32>
    %68 = arith.minimumf %67, %66 : vector<24x142xf32>
    %c0_19 = arith.constant 0 : index
    %c0_20 = arith.constant 0 : index
    %69 = vector.load %arg8[%c0_19, %c0_20] : memref<4x24xf32, #tpu.memory_space<vmem>>, vector<4x24xf32>
    %cst_21 = arith.constant dense<0.000000e+00> : vector<4x142xf32>
    %70 = tpu.matmul %69, %68, %cst_21 {dimension_numbers = #tpu.dot_dimension_numbers<[1], [0], [0], [1], [0, 0, 1, 1], [], []>} : vector<4x24xf32>, vector<24x142xf32>, vector<4x142xf32> -> vector<4x142xf32>
    %c0_22 = arith.constant 0 : index
    %c0_23 = arith.constant 0 : index
    %71 = vector.load %arg9[%c0_22, %c0_23] : memref<4x1xf32, #tpu.memory_space<vmem>>, vector<4x1xf32>
    %72 = vector.broadcast %71 : vector<4x1xf32> to vector<4x142xf32>
    %73 = arith.addf %70, %72 : vector<4x142xf32>
    %74 = vector.extract_strided_slice %73 {offsets = [0, 0], sizes = [4, 16], strides = [1, 1]} : vector<4x142xf32> to vector<4x16xf32>
    %75 = vector.extract_strided_slice %73 {offsets = [0, 18], sizes = [4, 16], strides = [1, 1]} : vector<4x142xf32> to vector<4x16xf32>
    %76 = vector.extract_strided_slice %73 {offsets = [0, 36], sizes = [4, 16], strides = [1, 1]} : vector<4x142xf32> to vector<4x16xf32>
    %77 = vector.extract_strided_slice %73 {offsets = [0, 54], sizes = [4, 16], strides = [1, 1]} : vector<4x142xf32> to vector<4x16xf32>
    %78 = vector.extract_strided_slice %73 {offsets = [0, 72], sizes = [4, 16], strides = [1, 1]} : vector<4x142xf32> to vector<4x16xf32>
    %79 = vector.extract_strided_slice %73 {offsets = [0, 90], sizes = [4, 16], strides = [1, 1]} : vector<4x142xf32> to vector<4x16xf32>
    %80 = vector.extract_strided_slice %73 {offsets = [0, 108], sizes = [4, 16], strides = [1, 1]} : vector<4x142xf32> to vector<4x16xf32>
    %81 = vector.extract_strided_slice %73 {offsets = [0, 126], sizes = [4, 16], strides = [1, 1]} : vector<4x142xf32> to vector<4x16xf32>
    %82 = tpu.concatenate %74, %75, %76, %77, %78, %79, %80, %81 in 1 : vector<4x16xf32>, vector<4x16xf32>, vector<4x16xf32>, vector<4x16xf32>, vector<4x16xf32>, vector<4x16xf32>, vector<4x16xf32>, vector<4x16xf32> -> vector<4x128xf32>
    %c0_24 = arith.constant 0 : index
    %c0_25 = arith.constant 0 : index
    %c0_26 = arith.constant 0 : index
    %83 = vector.load %arg10[%c0_24, %c0_25, %c0_26] : memref<1x4x128xf32, #tpu.memory_space<vmem>>, vector<1x4x128xf32>
    %84 = vector.shape_cast %83 : vector<1x4x128xf32> to vector<4x128xf32>
    %85 = arith.addf %82, %84 : vector<4x128xf32>
    %c0_27 = arith.constant 0 : index
    %c0_28 = arith.constant 0 : index
    %c0_29 = arith.constant 0 : index
    %86 = vector.load %arg11[%c0_27, %c0_28, %c0_29] : memref<1x4x128xf32, #tpu.memory_space<vmem>>, vector<1x4x128xf32>
    %87 = vector.shape_cast %86 : vector<1x4x128xf32> to vector<4x128xf32>
    %88 = vector.shape_cast %85 : vector<4x128xf32> to vector<1x4x128xf32>
    tpu.vector_store %arg11[%c0_27, %c0_28, %c0_29], %88 {strides = array<i32>} : memref<1x4x128xf32, #tpu.memory_space<vmem>>, vector<1x4x128xf32>,
    return
  }
  func.func @transform_0(%arg0: i32, %arg1: i32) -> (i32, i32, i32, i32) {
    %c0_i32 = arith.constant 0 : i32
    %c0_i32_0 = arith.constant 0 : i32
    %c0_i32_1 = arith.constant 0 : i32
    return %arg0, %arg1, %c0_i32, %c0_i32_0 : i32, i32, i32, i32
  }
  func.func @transform_1(%arg0: i32, %arg1: i32) -> (i32, i32) {
    %c0_i32 = arith.constant 0 : i32
    %c0_i32_0 = arith.constant 0 : i32
    %c0_i32_1 = arith.constant 0 : i32
    return %c0_i32, %c0_i32_0 : i32, i32
  }
  func.func @transform_2(%arg0: i32, %arg1: i32) -> (i32, i32) {
    %c0_i32 = arith.constant 0 : i32
    %c0_i32_0 = arith.constant 0 : i32
    %c0_i32_1 = arith.constant 0 : i32
    return %c0_i32, %c0_i32_0 : i32, i32
  }
  func.func @transform_3(%arg0: i32, %arg1: i32) -> (i32, i32, i32) {
    %c0_i32 = arith.constant 0 : i32
    %c0_i32_0 = arith.constant 0 : i32
    %c0_i32_1 = arith.constant 0 : i32
    return %arg1, %c0_i32, %c0_i32_0 : i32, i32, i32
  }
  func.func @transform_4(%arg0: i32, %arg1: i32) -> (i32, i32) {
    %c0_i32 = arith.constant 0 : i32
    %c0_i32_0 = arith.constant 0 : i32
    %c0_i32_1 = arith.constant 0 : i32
    return %c0_i32, %c0_i32_0 : i32, i32
  }
  func.func @transform_5(%arg0: i32, %arg1: i32) -> (i32, i32) {
    %c0_i32 = arith.constant 0 : i32
    %c0_i32_0 = arith.constant 0 : i32
    %c0_i32_1 = arith.constant 0 : i32
    return %c0_i32, %c0_i32_0 : i32, i32
  }
  func.func @transform_6(%arg0: i32, %arg1: i32) -> (i32, i32) {
    %c0_i32 = arith.constant 0 : i32
    %c0_i32_0 = arith.constant 0 : i32
    %c0_i32_1 = arith.constant 0 : i32
    return %c0_i32, %c0_i32_0 : i32, i32
  }
  func.func @transform_7(%arg0: i32, %arg1: i32) -> (i32, i32) {
    %c0_i32 = arith.constant 0 : i32
    %c0_i32_0 = arith.constant 0 : i32
    %c0_i32_1 = arith.constant 0 : i32
    return %c0_i32, %c0_i32_0 : i32, i32
  }
  func.func @transform_8(%arg0: i32, %arg1: i32) -> (i32, i32, i32) {
    %c0_i32 = arith.constant 0 : i32
    %c0_i32_0 = arith.constant 0 : i32
    return %arg0, %c0_i32, %arg1 : i32, i32, i32
  }
  func.func @transform_9(%arg0: i32, %arg1: i32) -> (i32, i32, i32) {
    %c0_i32 = arith.constant 0 : i32
    %c0_i32_0 = arith.constant 0 : i32
    return %arg0, %c0_i32, %arg1 : i32, i32, i32
  }
}

</mosaic_0001>

<llo_original>
// kernel: tpu_custom_call.1
$region0: #{tpu_custom_call.1}
  #allocation0 [shape = 'u32[]', space=smem, size = 0x4, offset = 0x4, fixed_abs, tag = 'smem constant byte address 0x4 - core index']
  #allocation1 [shape = 'u32[72,128]{1,0:T(1,128)}', space=vmem, size = 0x9000, scoped, tag = 'internal scratch']
  %s0 = inlined_call_operand.vmem [shape: f32[2,2,4,180], index: 0, kind: input, shape index: {}]
  %s1 = inlined_call_operand.vmem [shape: f32[24,4], index: 1, kind: input, shape index: {}]
  %s2 = inlined_call_operand.vmem [shape: f32[24,1], index: 2, kind: input, shape index: {}]
  %s3 = inlined_call_operand.vmem [shape: f32[2,1,180], index: 3, kind: input, shape index: {}]
  %s4 = inlined_call_operand.vmem [shape: f32[24,9], index: 4, kind: input, shape index: {}]
  %s5 = inlined_call_operand.vmem [shape: f32[24,1], index: 5, kind: input, shape index: {}]
  %s6 = inlined_call_operand.vmem [shape: f32[4,24], index: 6, kind: input, shape index: {}]
  %s7 = inlined_call_operand.vmem [shape: f32[4,1], index: 7, kind: input, shape index: {}]
  %s8 = inlined_call_operand.vmem [shape: f32[2,4,256], index: 8, kind: input, shape index: {}]
  %s9 = inlined_call_operand.hbm [shape: f32[2,4,256], index: 9, kind: output, shape index: {}]
  %s10 = sld [smem:[#allocation0]]
  $region69: #{tpu_custom_call.1} parent=0
    _
  %s12 = ssub.s32 1, %s10
  %s13 = scalar_select 0, %s12, %s10
  $region1: #{tpu_custom_call.1} parent=0
    #allocation2 [shape = 'u8[4096]{0}', space=vmem, size = 0x1000, scoped, tag = 'output window, operand 0']
    #allocation3 [shape = 's32[2]{0}', space=sflag, size = 0x8, scoped, tag = 'scoped memory for tpu_custom_call.1']
    %14 = vsyncpa [#allocation3], 0
    %s15 = scalar_lea.sflag [#allocation3], 1
    %16 = vsyncpa %s15, 0
    loop: start=0, step=1, limit=6
    $region2: #{tpu_custom_call.1} parent=1 // loop_pre_header
      _
    $region3: #{tpu_custom_call.1} parent=1 // loop_header
      %s18 = sphi 0, %s22
      %p19 = scmp.ge.s32.totalorder %s18, 6
      %s25 = sphi 0, %s37
      %s26 = sphi 0, %s33
      %s27 = sphi 0, %s25
      %s28 = sphi 0, %s26
      %s29 = sphi 0, %s27
      %s30 = sphi 0, %s28
      %s42 = sphi 0, %s44
      %s45 = sphi 0, %s42
      %s46 = sphi 0, %s45
      %s62 = sphi 0, %s46
      %s66 = sphi 0, %s66
      %s68 = sphi 0, %s66
      %s69 = sphi 0, %s68
      %s83 = sphi 0, %s69
      %s87 = sphi 0, %s87
      %s89 = sphi 0, %s87
      %s90 = sphi 0, %s89
      %s104 = sphi 0, %s90
      %s110 = sphi 0, %s112
      %s113 = sphi 0, %s110
      %s114 = sphi 0, %s113
      %s130 = sphi 0, %s114
      %s134 = sphi 0, %s134
      %s136 = sphi 0, %s134
      %s137 = sphi 0, %s136
      %s151 = sphi 0, %s137
      %s155 = sphi 0, %s155
      %s157 = sphi 0, %s155
      %s158 = sphi 0, %s157
      %s172 = sphi 0, %s158
      %s176 = sphi 0, %s176
      %s178 = sphi 0, %s176
      %s179 = sphi 0, %s178
      %s193 = sphi 0, %s179
      %s197 = sphi 0, %s197
      %s199 = sphi 0, %s197
      %s200 = sphi 0, %s199
      %s214 = sphi 0, %s200
      %s222 = sphi 0, %s224
      %s225 = sphi 0, %s222
      %s226 = sphi 0, %s225
      %s242 = sphi 0, %s226
      %s250 = sphi 0, %s252
      %s253 = sphi 0, %s250
      %s254 = sphi 0, %s253
      %s270 = sphi 0, %s254
    $region4: #{tpu_custom_call.1} parent=1 // loop_header_branch
      %21 = sbr.rel (%p19) target = $region8
    $region5: #{tpu_custom_call.1} parent=1 // loop_body
      %s23 = ssub.s32 %s18, 1
      %s24 = ssub.s32 %s18, 2
      %s31 = sadd.s32 1, %s26
      %p32 = scmp.ge.s32.totalorder %s31, 2
      %s33 = scalar_select %p32, 0, %s31
      %s34 = sadd.s32 1, %s25
      %s35 = scalar_select %p32, %s34, %s25
      %p36 = scmp.ge.s32.totalorder %s35, 2
      %s37 = scalar_select %p36, 0, %s35
      %s38 = ssub.s32 %s25, %s37
      %s39 = ssub.s32 %s26, %s33
      %s40 = sor.u32 %s38, %s39
      %p41 = scmp.eq.s32.totalorder %s40, 0
      %s43 = sadd.s32 %s42, 1
      %s44 = scalar_select %p41, %s42, %s43
      %p47 = pneg %p41
      %p48 = scmp.eq.s32.totalorder %s18, 3
      %p49 = por %p47, %p48
      %p50 = scmp.ne.s32.totalorder %s42, %s45
      %p51 = scmp.eq.s32.totalorder %s18, 0
      %p52 = por %p50, %p51
      %p53 = scmp.ne.s32.totalorder %s42, %s45
      %p54 = scmp.eq.s32.totalorder %s23, 3
      %p55 = por %p53, %p54
      %p56 = scmp.ne.s32.totalorder %s45, %s46
      %p57 = scmp.eq.s32.totalorder %s23, 0
      %p58 = por %p56, %p57
      %p59 = scmp.ne.s32.totalorder %s45, %s46
      %p60 = scmp.eq.s32.totalorder %s24, 3
      %p61 = por %p59, %p60
      %p63 = scmp.ne.s32.totalorder %s46, %s62
      %p64 = scmp.eq.s32.totalorder %s24, 0
      %p65 = por %p63, %p64
      %s67 = sadd.s32 %s66, 1
      %p70 = scmp.eq.s32.totalorder %s18, 3
      %p71 = scmp.ne.s32.totalorder %s66, %s68
      %p72 = scmp.eq.s32.totalorder %s18, 0
      %p73 = por %p71, %p72
      %p74 = scmp.ne.s32.totalorder %s66, %s68
      %p75 = scmp.eq.s32.totalorder %s23, 3
      %p76 = por %p74, %p75
      %p77 = scmp.ne.s32.totalorder %s68, %s69
      %p78 = scmp.eq.s32.totalorder %s23, 0
      %p79 = por %p77, %p78
      %p80 = scmp.ne.s32.totalorder %s68, %s69
      %p81 = scmp.eq.s32.totalorder %s24, 3
      %p82 = por %p80, %p81
      %p84 = scmp.ne.s32.totalorder %s69, %s83
      %p85 = scmp.eq.s32.totalorder %s24, 0
      %p86 = por %p84, %p85
      %s88 = sadd.s32 %s87, 1
      %p91 = scmp.eq.s32.totalorder %s18, 3
      %p92 = scmp.ne.s32.totalorder %s87, %s89
      %p93 = scmp.eq.s32.totalorder %s18, 0
      %p94 = por %p92, %p93
      %p95 = scmp.ne.s32.totalorder %s87, %s89
      %p96 = scmp.eq.s32.totalorder %s23, 3
      %p97 = por %p95, %p96
      %p98 = scmp.ne.s32.totalorder %s89, %s90
      %p99 = scmp.eq.s32.totalorder %s23, 0
      %p100 = por %p98, %p99
      %p101 = scmp.ne.s32.totalorder %s89, %s90
      %p102 = scmp.eq.s32.totalorder %s24, 3
      %p103 = por %p101, %p102
      %p105 = scmp.ne.s32.totalorder %s90, %s104
      %p106 = scmp.eq.s32.totalorder %s24, 0
      %p107 = por %p105, %p106
      %s108 = ssub.s32 %s26, %s33
      %p109 = scmp.eq.s32.totalorder %s108, 0
      %s111 = sadd.s32 %s110, 1
      %s112 = scalar_select %p109, %s110, %s111
      %p115 = pneg %p109
      %p116 = scmp.eq.s32.totalorder %s18, 3
      %p117 = por %p115, %p116
      %p118 = scmp.ne.s32.totalorder %s110, %s113
      %p119 = scmp.eq.s32.totalorder %s18, 0
      %p120 = por %p118, %p119
      %p121 = scmp.ne.s32.totalorder %s110, %s113
      %p122 = scmp.eq.s32.totalorder %s23, 3
      %p123 = por %p121, %p122
      %p124 = scmp.ne.s32.totalorder %s113, %s114
      %p125 = scmp.eq.s32.totalorder %s23, 0
      %p126 = por %p124, %p125
      %p127 = scmp.ne.s32.totalorder %s113, %s114
      %p128 = scmp.eq.s32.totalorder %s24, 3
      %p129 = por %p127, %p128
      %p131 = scmp.ne.s32.totalorder %s114, %s130
      %p132 = scmp.eq.s32.totalorder %s24, 0
      %p133 = por %p131, %p132
      %s135 = sadd.s32 %s134, 1
      %p138 = scmp.eq.s32.totalorder %s18, 3
      %p139 = scmp.ne.s32.totalorder %s134, %s136
      %p140 = scmp.eq.s32.totalorder %s18, 0
      %p141 = por %p139, %p140
      %p142 = scmp.ne.s32.totalorder %s134, %s136
      %p143 = scmp.eq.s32.totalorder %s23, 3
      %p144 = por %p142, %p143
      %p145 = scmp.ne.s32.totalorder %s136, %s137
      %p146 = scmp.eq.s32.totalorder %s23, 0
      %p147 = por %p145, %p146
      %p148 = scmp.ne.s32.totalorder %s136, %s137
      %p149 = scmp.eq.s32.totalorder %s24, 3
      %p150 = por %p148, %p149
      %p152 = scmp.ne.s32.totalorder %s137, %s151
      %p153 = scmp.eq.s32.totalorder %s24, 0
      %p154 = por %p152, %p153
      %s156 = sadd.s32 %s155, 1
      %p159 = scmp.eq.s32.totalorder %s18, 3
      %p160 = scmp.ne.s32.totalorder %s155, %s157
      %p161 = scmp.eq.s32.totalorder %s18, 0
      %p162 = por %p160, %p161
      %p163 = scmp.ne.s32.totalorder %s155, %s157
      %p164 = scmp.eq.s32.totalorder %s23, 3
      %p165 = por %p163, %p164
      %p166 = scmp.ne.s32.totalorder %s157, %s158
      %p167 = scmp.eq.s32.totalorder %s23, 0
      %p168 = por %p166, %p167
      %p169 = scmp.ne.s32.totalorder %s157, %s158
      %p170 = scmp.eq.s32.totalorder %s24, 3
      %p171 = por %p169, %p170
      %p173 = scmp.ne.s32.totalorder %s158, %s172
      %p174 = scmp.eq.s32.totalorder %s24, 0
      %p175 = por %p173, %p174
      %s177 = sadd.s32 %s176, 1
      %p180 = scmp.eq.s32.totalorder %s18, 3
      %p181 = scmp.ne.s32.totalorder %s176, %s178
      %p182 = scmp.eq.s32.totalorder %s18, 0
      %p183 = por %p181, %p182
      %p184 = scmp.ne.s32.totalorder %s176, %s178
      %p185 = scmp.eq.s32.totalorder %s23, 3
      %p186 = por %p184, %p185
      %p187 = scmp.ne.s32.totalorder %s178, %s179
      %p188 = scmp.eq.s32.totalorder %s23, 0
      %p189 = por %p187, %p188
      %p190 = scmp.ne.s32.totalorder %s178, %s179
      %p191 = scmp.eq.s32.totalorder %s24, 3
      %p192 = por %p190, %p191
      %p194 = scmp.ne.s32.totalorder %s179, %s193
      %p195 = scmp.eq.s32.totalorder %s24, 0
      %p196 = por %p194, %p195
      %s198 = sadd.s32 %s197, 1
      %p201 = scmp.eq.s32.totalorder %s18, 3
      %p202 = scmp.ne.s32.totalorder %s197, %s199
      %p203 = scmp.eq.s32.totalorder %s18, 0
      %p204 = por %p202, %p203
      %p205 = scmp.ne.s32.totalorder %s197, %s199
      %p206 = scmp.eq.s32.totalorder %s23, 3
      %p207 = por %p205, %p206
      %p208 = scmp.ne.s32.totalorder %s199, %s200
      %p209 = scmp.eq.s32.totalorder %s23, 0
      %p210 = por %p208, %p209
      %p211 = scmp.ne.s32.totalorder %s199, %s200
      %p212 = scmp.eq.s32.totalorder %s24, 3
      %p213 = por %p211, %p212
      %p215 = scmp.ne.s32.totalorder %s200, %s214
      %p216 = scmp.eq.s32.totalorder %s24, 0
      %p217 = por %p215, %p216
      %s218 = ssub.s32 %s25, %s37
      %s219 = ssub.s32 %s26, %s33
      %s220 = sor.u32 %s218, %s219
      %p221 = scmp.eq.s32.totalorder %s220, 0
      %s223 = sadd.s32 %s222, 1
      %s224 = scalar_select %p221, %s222, %s223
      %p227 = pneg %p221
      %p228 = scmp.eq.s32.totalorder %s18, 3
      %p229 = por %p227, %p228
      %p230 = scmp.ne.s32.totalorder %s222, %s225
      %p231 = scmp.eq.s32.totalorder %s18, 0
      %p232 = por %p230, %p231
      %p233 = scmp.ne.s32.totalorder %s222, %s225
      %p234 = scmp.eq.s32.totalorder %s23, 3
      %p235 = por %p233, %p234
      %p236 = scmp.ne.s32.totalorder %s225, %s226
      %p237 = scmp.eq.s32.totalorder %s23, 0
      %p238 = por %p236, %p237
      %p239 = scmp.ne.s32.totalorder %s225, %s226
      %p240 = scmp.eq.s32.totalorder %s24, 3
      %p241 = por %p239, %p240
      %p243 = scmp.ne.s32.totalorder %s226, %s242
      %p244 = scmp.eq.s32.totalorder %s24, 0
      %p245 = por %p243, %p244
      %s246 = ssub.s32 %s25, %s37
      %s247 = ssub.s32 %s26, %s33
      %s248 = sor.u32 %s246, %s247
      %p249 = scmp.eq.s32.totalorder %s248, 0
      %s251 = sadd.s32 %s250, 1
      %s252 = scalar_select %p249, %s250, %s251
      %p255 = pneg %p249
      %p256 = scmp.eq.s32.totalorder %s18, 3
      %p257 = por %p255, %p256
      %p258 = scmp.ne.s32.totalorder %s250, %s253
      %p259 = scmp.eq.s32.totalorder %s18, 0
      %p260 = por %p258, %p259
      %p261 = scmp.ne.s32.totalorder %s250, %s253
      %p262 = scmp.eq.s32.totalorder %s23, 3
      %p263 = por %p261, %p262
      %p264 = scmp.ne.s32.totalorder %s253, %s254
      %p265 = scmp.eq.s32.totalorder %s23, 0
      %p266 = por %p264, %p265
      %p267 = scmp.ne.s32.totalorder %s253, %s254
      %p268 = scmp.eq.s32.totalorder %s24, 3
      %p269 = por %p267, %p268
      %p271 = scmp.ne.s32.totalorder %s254, %s270
      %p272 = scmp.eq.s32.totalorder %s24, 0
      %p273 = por %p271, %p272
      %p274 = scmp.le.s32.totalorder 1, %s18
      %p275 = scmp.lt.s32.totalorder %s18, 5
      %p276 = pnand %p274, %p275
      %p277 = pneg %p276
      // Predicated region
      $region9: #{tpu_custom_call.1} parent=5 // pred_check
        _
      $region10: #{tpu_custom_call.1} parent=5 // pred_check_branch
        %279 = sbr.rel (%p276) target = $region12
      $region11: #{tpu_custom_call.1} parent=5 // pred_region
        %s280 = ssub.s32 %s18, 1
        // Predicated region
        $region13: #{tpu_custom_call.1} parent=11 // pred_check
          %p281 = pneg %p79
        $region14: #{tpu_custom_call.1} parent=11 // pred_check_branch
          %283 = sbr.rel (%p281) target = $region16
        $region15: #{tpu_custom_call.1} parent=11 // pred_region
          _
        $region16: #{tpu_custom_call.1} parent=11 // pred_fallthru
          _
        // Predicated region
        $region17: #{tpu_custom_call.1} parent=11 // pred_check
          %p284 = pneg %p100
        $region18: #{tpu_custom_call.1} parent=11 // pred_check_branch
          %286 = sbr.rel (%p284) target = $region20
        $region19: #{tpu_custom_call.1} parent=11 // pred_region
          _
        $region20: #{tpu_custom_call.1} parent=11 // pred_fallthru
          _
        // Predicated region
        $region21: #{tpu_custom_call.1} parent=11 // pred_check
          %p287 = pneg %p147
        $region22: #{tpu_custom_call.1} parent=11 // pred_check_branch
          %289 = sbr.rel (%p287) target = $region24
        $region23: #{tpu_custom_call.1} parent=11 // pred_region
          _
        $region24: #{tpu_custom_call.1} parent=11 // pred_fallthru
          _
        // Predicated region
        $region25: #{tpu_custom_call.1} parent=11 // pred_check
          %p290 = pneg %p168
        $region26: #{tpu_custom_call.1} parent=11 // pred_check_branch
          %292 = sbr.rel (%p290) target = $region28
        $region27: #{tpu_custom_call.1} parent=11 // pred_region
          _
        $region28: #{tpu_custom_call.1} parent=11 // pred_fallthru
          _
        // Predicated region
        $region29: #{tpu_custom_call.1} parent=11 // pred_check
          %p293 = pneg %p189
        $region30: #{tpu_custom_call.1} parent=11 // pred_check_branch
          %295 = sbr.rel (%p293) target = $region32
        $region31: #{tpu_custom_call.1} parent=11 // pred_region
          _
        $region32: #{tpu_custom_call.1} parent=11 // pred_fallthru
          _
        // Predicated region
        $region33: #{tpu_custom_call.1} parent=11 // pred_check
          %p296 = pneg %p210
        $region34: #{tpu_custom_call.1} parent=11 // pred_check_branch
          %298 = sbr.rel (%p296) target = $region36
        $region35: #{tpu_custom_call.1} parent=11 // pred_region
          _
        $region36: #{tpu_custom_call.1} parent=11 // pred_fallthru
          _
      $region12: #{tpu_custom_call.1} parent=5 // pred_fallthru
        _
      %p299 = scmp.lt.s32.totalorder %s18, 4
      // Predicated region
      $region37: #{tpu_custom_call.1} parent=5 // pred_check
        %p300 = pneg %p299
      $region38: #{tpu_custom_call.1} parent=5 // pred_check_branch
        %302 = sbr.rel (%p300) target = $region40
      $region39: #{tpu_custom_call.1} parent=5 // pred_region
        // Predicated region
        $region41: #{tpu_custom_call.1} parent=39 // pred_check
          %p303 = pneg %p52
        $region42: #{tpu_custom_call.1} parent=39 // pred_check_branch
          %305 = sbr.rel (%p303) target = $region44
        $region43: #{tpu_custom_call.1} parent=39 // pred_region
          %p306 = scmp.lt.s32.totalorder %s25, 1
          %s307 = scalar_select %p306, %s25, 1
          %p308 = scmp.lt.s32.totalorder %s26, 1
          %s309 = scalar_select %p308, %s26, 1
          %s310 = smul.addr %s309, 2
          %s311 = smul.addr %s307, 4
          %s312 = sadd.s32 %s310, %s311
          %s313 = smul.addr %s312, 4
          %s314 = scalar_lea.vmem %s0, %s313
        $region44: #{tpu_custom_call.1} parent=39 // pred_fallthru
          _
        // Predicated region
        $region45: #{tpu_custom_call.1} parent=39 // pred_check
          %p315 = pneg %p120
        $region46: #{tpu_custom_call.1} parent=39 // pred_check_branch
          %317 = sbr.rel (%p315) target = $region48
        $region47: #{tpu_custom_call.1} parent=39 // pred_region
          %p318 = scmp.lt.s32.totalorder %s26, 1
          %s319 = scalar_select %p318, %s26, 1
          %s320 = smul.addr %s319, 2
          %s321 = scalar_lea.vmem %s3, %s320
        $region48: #{tpu_custom_call.1} parent=39 // pred_fallthru
          _
        // Predicated region
        $region49: #{tpu_custom_call.1} parent=39 // pred_check
          %p322 = pneg %p232
        $region50: #{tpu_custom_call.1} parent=39 // pred_check_branch
          %324 = sbr.rel (%p322) target = $region52
        $region51: #{tpu_custom_call.1} parent=39 // pred_region
          %p325 = scmp.lt.s32.totalorder %s25, 1
          %s326 = scalar_select %p325, %s25, 1
          %p327 = scmp.lt.s32.totalorder %s26, 1
          %s328 = scalar_select %p327, %s26, 1
          %s329 = smul.addr %s326, 2
          %s330 = sadd.s32 %s328, %s329
          %s331 = smul.addr %s330, 4
          %s332 = scalar_lea.vmem %s8, %s331
        $region52: #{tpu_custom_call.1} parent=39 // pred_fallthru
          _
      $region40: #{tpu_custom_call.1} parent=5 // pred_fallthru
        _
      %p333 = scmp.le.s32.totalorder 1, %s18
      %p334 = scmp.lt.s32.totalorder %s18, 5
      %p335 = pnand %p333, %p334
      %p336 = pneg %p335
      // Predicated region
      $region53: #{tpu_custom_call.1} parent=5 // pred_check
        _
      $region54: #{tpu_custom_call.1} parent=5 // pred_check_branch
        %338 = sbr.rel (%p335) target = $region56
      $region55: #{tpu_custom_call.1} parent=5 // pred_region
        %s339 = ssub.s32 %s18, 1
        %p340 = scmp.lt.s32.totalorder %s27, 1
        %s341 = scalar_select %p340, %s27, 1
        %p342 = scmp.lt.s32.totalorder %s28, 1
        %s343 = scalar_select %p342, %s28, 1
        %s344 = smul.addr %s343, 2
        %s345 = smul.addr %s341, 4
        %s346 = sadd.s32 %s344, %s345
        %s347 = smul.addr %s346, 4
        %s348 = scalar_lea.vmem %s0, %s347
        %p349 = pneg %p58
        %p350 = pneg %p55
        %p351 = pneg %p79
        %p352 = pneg %p76
        %p353 = pneg %p100
        %p354 = pneg %p97
        %p355 = scmp.lt.s32.totalorder %s28, 1
        %s356 = scalar_select %p355, %s28, 1
        %s357 = smul.addr %s356, 2
        %s358 = scalar_lea.vmem %s3, %s357
        %p359 = pneg %p126
        %p360 = pneg %p123
        %p361 = pneg %p147
        %p362 = pneg %p144
        %p363 = pneg %p168
        %p364 = pneg %p165
        %p365 = pneg %p189
        %p366 = pneg %p186
        %p367 = pneg %p210
        %p368 = pneg %p207
        %p369 = scmp.lt.s32.totalorder %s27, 1
        %s370 = scalar_select %p369, %s27, 1
        %p371 = scmp.lt.s32.totalorder %s28, 1
        %s372 = scalar_select %p371, %s28, 1
        %s373 = smul.addr %s370, 2
        %s374 = sadd.s32 %s372, %s373
        %s375 = smul.addr %s374, 4
        %s376 = scalar_lea.vmem %s8, %s375
        %p377 = pneg %p238
        %p378 = pneg %p235
        %p379 = pneg %p266
        %p380 = pneg %p263
        %s381 = sand.u32 %s253, 1
        %s382 = scalar_lea.sflag [#allocation3], %s381
        %s383 = sand.u32 %s253, 1
        %s384 = smul.addr %s383, 4
        %s385 = scalar_lea.vmem [#allocation2], %s384
        %p386 = scmp.lt.s32.totalorder %s27, 1
        %s387 = scalar_select %p386, %s27, 1
        %p388 = scmp.lt.s32.totalorder %s28, 1
        %s389 = scalar_select %p388, %s28, 1
        %s390 = smul.addr %s389, 2
        %s391 = smul.addr %s387, 4
        %s392 = sadd.s32 %s390, %s391
        %s393 = smul.addr %s392, 4
        %s394 = scalar_lea.vmem %s0, %s393
        %p395 = scmp.lt.s32.totalorder %s28, 1
        %s396 = scalar_select %p395, %s28, 1
        %s397 = smul.addr %s396, 2
        %s398 = scalar_lea.vmem %s3, %s397
        %p399 = scmp.lt.s32.totalorder %s27, 1
        %s400 = scalar_select %p399, %s27, 1
        %p401 = scmp.lt.s32.totalorder %s28, 1
        %s402 = scalar_select %p401, %s28, 1
        %s403 = smul.addr %s400, 2
        %s404 = sadd.s32 %s402, %s403
        %s405 = smul.addr %s404, 4
        %s406 = scalar_lea.vmem %s8, %s405
        %v407 = vld [vmem:[%s394] sm:$0xff]
        %v408 = vld [vmem:[%s1] sm:$0xff]
        %v409 = vld [vmem:[%s1 + $0x8] sm:$0xff]
        %v410 = vld [vmem:[%s1 + $0x10] sm:$0xff]
        %v411 = vld [vmem:[%s2] sm:$0xff]
        %v412 = vld [vmem:[%s2 + $0x8] sm:$0xff]
        %v413 = vld [vmem:[%s2 + $0x10] sm:$0xff]
        %415 = vset.pattern.permute.xlu0 0
        %416 = vperm.xlu0 %415, %v411
        %v417 = vpop.permute.xlu0 %416
        %420 = vset.pattern.permute.xlu0 0
        %421 = vperm.xlu0 %420, %v412
        %v422 = vpop.permute.xlu0 %421
        %425 = vset.pattern.permute.xlu0 0
        %426 = vperm.xlu0 %425, %v413
        %v427 = vpop.permute.xlu0 %426
        %430 = vst [vmem:[#allocation1] ss:$2 sm:$0xff] %v407
        %v431 = vld.sshfl [vmem:[#allocation1] sm:$0xff pattern:$0x75316420]
        %v432 = vld.sshfl [vmem:[#allocation1 + $0x8] sm:$0xff pattern:$0x75316420]
        %vm433 = vcmask 31744
        %v435 = vsel %vm433, %v408, 0
        %v438 = vsel %vm433, %v409, 0
        %v441 = vsel %vm433, %v410, 0
        %vm443 = vcmask 1043456
        %v444 = vsel %vm443, %v431, 0
        %v446 = vsel %vm443, %v432, 0
        %448 = vmatpush.msra.mxu0 0.0
        %449 = vmatpush.msra.mxu0 0.0
        %450 = vmatpush.msra.mxu0 0.0
        %451 = vmatpush.msra.mxu0 0.0
        %452 = vmatpush.msra.mxu0 0.0
        %453 = vmatpush.msra.mxu0 0.0
        %454 = vmatpush.msra.mxu0 0.0
        %455 = vmatpush.msra.mxu0 0.0
        %456 = vmatpush.msra.mxu0 0.0
        %457 = vmatpush.msra.mxu0 0.0
        %458 = vmatpush.msra.mxu0 0.0
        %459 = vmatpush.msra.mxu0 0.0
        %460 = vmatpush.msra.mxu0 0.0
        %461 = vmatpush.msra.mxu0 0.0
        %462 = vmatpush.msra.mxu0 0.0
        %463 = vmatpush.msra.mxu0 %v444
        %464 = vmatmul.f32.gmra.mxu0 %v435
        %v465 = vpop.f32.mrf.mxu0
        %v466 = vadd.f32 %v417, %v465
        %467 = vmatmul.f32.gmra.mxu0 %v438
        %v468 = vpop.f32.mrf.mxu0
        %v469 = vadd.f32 %v422, %v468
        %470 = vmatmul.f32.gmra.mxu0 %v441
        %v471 = vpop.f32.mrf.mxu0
        %v472 = vadd.f32 %v427, %v471
        %473 = vdwg.mxu0
        %474 = vmatpush.msra.mxu0 0.0
        %475 = vmatpush.msra.mxu0 0.0
        %476 = vmatpush.msra.mxu0 0.0
        %477 = vmatpush.msra.mxu0 0.0
        %478 = vmatpush.msra.mxu0 0.0
        %479 = vmatpush.msra.mxu0 0.0
        %480 = vmatpush.msra.mxu0 0.0
        %481 = vmatpush.msra.mxu0 0.0
        %482 = vmatpush.msra.mxu0 0.0
        %483 = vmatpush.msra.mxu0 0.0
        %484 = vmatpush.msra.mxu0 0.0
        %485 = vmatpush.msra.mxu0 0.0
        %486 = vmatpush.msra.mxu0 0.0
        %487 = vmatpush.msra.mxu0 0.0
        %488 = vmatpush.msra.mxu0 0.0
        %489 = vmatpush.msra.mxu0 %v446
        %490 = vmatmul.f32.gmra.mxu0 %v435
        %v491 = vpop.f32.mrf.mxu0
        %v492 = vadd.f32 %v417, %v491
        %493 = vmatmul.f32.gmra.mxu0 %v438
        %v494 = vpop.f32.mrf.mxu0
        %v495 = vadd.f32 %v422, %v494
        %496 = vmatmul.f32.gmra.mxu0 %v441
        %v497 = vpop.f32.mrf.mxu0
        %v498 = vadd.f32 %v427, %v497
        %499 = vdwg.mxu0
        %v500 = vmax.f32 %v466, 0.0
        %v501 = vmax.f32 %v492, 0.0
        %v502 = vmax.f32 %v469, 0.0
        %v503 = vmax.f32 %v495, 0.0
        %v504 = vmax.f32 %v472, 0.0
        %v505 = vmax.f32 %v498, 0.0
        %v506 = vmin.f32 %v500, 6.0
        %v507 = vmin.f32 %v501, 6.0
        %v508 = vmin.f32 %v502, 6.0
        %v509 = vmin.f32 %v503, 6.0
        %v510 = vmin.f32 %v504, 6.0
        %v511 = vmin.f32 %v505, 6.0
        %v512 = vld [vmem:[%s398] sm:$0x3]
        %v514 = vperm.slane %v512, 0
        %v515 = vperm.slane %v512, 1
        %v518 = vmul.f32 %v506, %v514
        %v519 = vmul.f32 %v507, %v515
        %v520 = vmul.f32 %v508, %v514
        %v521 = vmul.f32 %v509, %v515
        %v522 = vmul.f32 %v510, %v514
        %v523 = vmul.f32 %v511, %v515
        %v524 = vld [vmem:[%s4] sm:$0xff]
        %v525 = vld [vmem:[%s4 + $0x8] sm:$0xff]
        %v526 = vld [vmem:[%s4 + $0x10] sm:$0xff]
        %528 = vset.pattern.permute.xlu0 0
        %529 = vperm.xlu0 %528, %v524
        %v530 = vpop.permute.xlu0 %529
        %533 = vset.pattern.permute.xlu0 0
        %534 = vperm.xlu0 %533, %v525
        %v535 = vpop.permute.xlu0 %534
        %538 = vset.pattern.permute.xlu0 0
        %539 = vperm.xlu0 %538, %v526
        %v540 = vpop.permute.xlu0 %539
        %v542 = vmul.f32 %v518, %v530
        %v543 = vmul.f32 %v519, %v530
        %v544 = vmul.f32 %v520, %v535
        %v545 = vmul.f32 %v521, %v535
        %v546 = vmul.f32 %v522, %v540
        %v547 = vmul.f32 %v523, %v540
        %v548 = vadd.f32 %v542, 0.0
        %v549 = vadd.f32 %v543, 0.0
        %v550 = vadd.f32 %v544, 0.0
        %v551 = vadd.f32 %v545, 0.0
        %v552 = vadd.f32 %v546, 0.0
        %v553 = vadd.f32 %v547, 0.0
        %554 = vset.pattern.permute.xlu0 1
        %555 = vperm.xlu0 %554, %v524
        %v556 = vpop.permute.xlu0 %555
        %558 = vset.pattern.permute.xlu0 1
        %559 = vperm.xlu0 %558, %v525
        %v560 = vpop.permute.xlu0 %559
        %562 = vset.pattern.permute.xlu0 1
        %563 = vperm.xlu0 %562, %v526
        %v564 = vpop.permute.xlu0 %563
        %v566 = vmul.f32 %v518, %v556
        %v567 = vmul.f32 %v519, %v556
        %v568 = vmul.f32 %v520, %v560
        %v569 = vmul.f32 %v521, %v560
        %v570 = vmul.f32 %v522, %v564
        %v571 = vmul.f32 %v523, %v564
        %578 = vrot.lane.b32.xlu0 %v566, 127
        %v579 = vpop.permute.xlu0 %578
        %580 = vrot.lane.b32.xlu0 %v567, 127
        %v581 = vpop.permute.xlu0 %580
        %582 = vrot.lane.b32.xlu0 %v568, 127
        %v583 = vpop.permute.xlu0 %582
        %584 = vrot.lane.b32.xlu0 %v569, 127
        %v585 = vpop.permute.xlu0 %584
        %586 = vrot.lane.b32.xlu0 %v570, 127
        %v587 = vpop.permute.xlu0 %586
        %588 = vrot.lane.b32.xlu0 %v571, 127
        %v589 = vpop.permute.xlu0 %588
        %vm590 = vcmask 1039360
        %v591 = vsel %vm590, %v579, %v581
        %v592 = vsel %vm590, %v583, %v585
        %v593 = vsel %vm590, %v587, %v589
        %v600 = vadd.f32 %v548, %v591
        %v601 = vadd.f32 %v549, %v581
        %v602 = vadd.f32 %v550, %v592
        %v603 = vadd.f32 %v551, %v585
        %v604 = vadd.f32 %v552, %v593
        %v605 = vadd.f32 %v553, %v589
        %606 = vset.pattern.permute.xlu0 2
        %607 = vperm.xlu0 %606, %v524
        %v608 = vpop.permute.xlu0 %607
        %610 = vset.pattern.permute.xlu0 2
        %611 = vperm.xlu0 %610, %v525
        %v612 = vpop.permute.xlu0 %611
        %614 = vset.pattern.permute.xlu0 2
        %615 = vperm.xlu0 %614, %v526
        %v616 = vpop.permute.xlu0 %615
        %v618 = vmul.f32 %v518, %v608
        %v619 = vmul.f32 %v519, %v608
        %v620 = vmul.f32 %v520, %v612
        %v621 = vmul.f32 %v521, %v612
        %v622 = vmul.f32 %v522, %v616
        %v623 = vmul.f32 %v523, %v616
        %630 = vrot.lane.b32.xlu0 %v618, 126
        %v631 = vpop.permute.xlu0 %630
        %632 = vrot.lane.b32.xlu0 %v619, 126
        %v633 = vpop.permute.xlu0 %632
        %634 = vrot.lane.b32.xlu0 %v620, 126
        %v635 = vpop.permute.xlu0 %634
        %636 = vrot.lane.b32.xlu0 %v621, 126
        %v637 = vpop.permute.xlu0 %636
        %638 = vrot.lane.b32.xlu0 %v622, 126
        %v639 = vpop.permute.xlu0 %638
        %640 = vrot.lane.b32.xlu0 %v623, 126
        %v641 = vpop.permute.xlu0 %640
        %vm642 = vcmask 1031168
        %v643 = vsel %vm642, %v631, %v633
        %v644 = vsel %vm642, %v635, %v637
        %v645 = vsel %vm642, %v639, %v641
        %v652 = vadd.f32 %v600, %v643
        %v653 = vadd.f32 %v601, %v633
        %v654 = vadd.f32 %v602, %v644
        %v655 = vadd.f32 %v603, %v637
        %v656 = vadd.f32 %v604, %v645
        %v657 = vadd.f32 %v605, %v641
        %658 = vset.pattern.permute.xlu0 3
        %659 = vperm.xlu0 %658, %v524
        %v660 = vpop.permute.xlu0 %659
        %662 = vset.pattern.permute.xlu0 3
        %663 = vperm.xlu0 %662, %v525
        %v664 = vpop.permute.xlu0 %663
        %666 = vset.pattern.permute.xlu0 3
        %667 = vperm.xlu0 %666, %v526
        %v668 = vpop.permute.xlu0 %667
        %v670 = vmul.f32 %v518, %v660
        %v671 = vmul.f32 %v519, %v660
        %v672 = vmul.f32 %v520, %v664
        %v673 = vmul.f32 %v521, %v664
        %v674 = vmul.f32 %v522, %v668
        %v675 = vmul.f32 %v523, %v668
        %682 = vrot.lane.b32.xlu0 %v670, 110
        %v683 = vpop.permute.xlu0 %682
        %684 = vrot.lane.b32.xlu0 %v671, 110
        %v685 = vpop.permute.xlu0 %684
        %686 = vrot.lane.b32.xlu0 %v672, 110
        %v687 = vpop.permute.xlu0 %686
        %688 = vrot.lane.b32.xlu0 %v673, 110
        %v689 = vpop.permute.xlu0 %688
        %690 = vrot.lane.b32.xlu0 %v674, 110
        %v691 = vpop.permute.xlu0 %690
        %692 = vrot.lane.b32.xlu0 %v675, 110
        %v693 = vpop.permute.xlu0 %692
        %vm694 = vcmask 900096
        %v695 = vsel %vm694, %v683, %v685
        %v696 = vsel %vm694, %v687, %v689
        %v697 = vsel %vm694, %v691, %v693
        %v704 = vadd.f32 %v652, %v695
        %v705 = vadd.f32 %v653, %v685
        %v706 = vadd.f32 %v654, %v696
        %v707 = vadd.f32 %v655, %v689
        %v708 = vadd.f32 %v656, %v697
        %v709 = vadd.f32 %v657, %v693
        %710 = vset.pattern.permute.xlu0 4
        %711 = vperm.xlu0 %710, %v524
        %v712 = vpop.permute.xlu0 %711
        %714 = vset.pattern.permute.xlu0 4
        %715 = vperm.xlu0 %714, %v525
        %v716 = vpop.permute.xlu0 %715
        %718 = vset.pattern.permute.xlu0 4
        %719 = vperm.xlu0 %718, %v526
        %v720 = vpop.permute.xlu0 %719
        %v722 = vmul.f32 %v518, %v712
        %v723 = vmul.f32 %v519, %v712
        %v724 = vmul.f32 %v520, %v716
        %v725 = vmul.f32 %v521, %v716
        %v726 = vmul.f32 %v522, %v720
        %v727 = vmul.f32 %v523, %v720
        %734 = vrot.lane.b32.xlu0 %v722, 109
        %v735 = vpop.permute.xlu0 %734
        %736 = vrot.lane.b32.xlu0 %v723, 109
        %v737 = vpop.permute.xlu0 %736
        %738 = vrot.lane.b32.xlu0 %v724, 109
        %v739 = vpop.permute.xlu0 %738
        %740 = vrot.lane.b32.xlu0 %v725, 109
        %v741 = vpop.permute.xlu0 %740
        %742 = vrot.lane.b32.xlu0 %v726, 109
        %v743 = vpop.permute.xlu0 %742
        %744 = vrot.lane.b32.xlu0 %v727, 109
        %v745 = vpop.permute.xlu0 %744
        %vm746 = vcmask 891904
        %v747 = vsel %vm746, %v735, %v737
        %v748 = vsel %vm746, %v739, %v741
        %v749 = vsel %vm746, %v743, %v745
        %v756 = vadd.f32 %v704, %v747
        %v757 = vadd.f32 %v705, %v737
        %v758 = vadd.f32 %v706, %v748
        %v759 = vadd.f32 %v707, %v741
        %v760 = vadd.f32 %v708, %v749
        %v761 = vadd.f32 %v709, %v745
        %762 = vset.pattern.permute.xlu0 5
        %763 = vperm.xlu0 %762, %v524
        %v764 = vpop.permute.xlu0 %763
        %766 = vset.pattern.permute.xlu0 5
        %767 = vperm.xlu0 %766, %v525
        %v768 = vpop.permute.xlu0 %767
        %770 = vset.pattern.permute.xlu0 5
        %771 = vperm.xlu0 %770, %v526
        %v772 = vpop.permute.xlu0 %771
        %v774 = vmul.f32 %v518, %v764
        %v775 = vmul.f32 %v519, %v764
        %v776 = vmul.f32 %v520, %v768
        %v777 = vmul.f32 %v521, %v768
        %v778 = vmul.f32 %v522, %v772
        %v779 = vmul.f32 %v523, %v772
        %786 = vrot.lane.b32.xlu0 %v774, 108
        %v787 = vpop.permute.xlu0 %786
        %788 = vrot.lane.b32.xlu0 %v775, 108
        %v789 = vpop.permute.xlu0 %788
        %790 = vrot.lane.b32.xlu0 %v776, 108
        %v791 = vpop.permute.xlu0 %790
        %792 = vrot.lane.b32.xlu0 %v777, 108
        %v793 = vpop.permute.xlu0 %792
        %794 = vrot.lane.b32.xlu0 %v778, 108
        %v795 = vpop.permute.xlu0 %794
        %796 = vrot.lane.b32.xlu0 %v779, 108
        %v797 = vpop.permute.xlu0 %796
        %vm798 = vcmask 883712
        %v799 = vsel %vm798, %v787, %v789
        %v800 = vsel %vm798, %v791, %v793
        %v801 = vsel %vm798, %v795, %v797
        %v808 = vadd.f32 %v756, %v799
        %v809 = vadd.f32 %v757, %v789
        %v810 = vadd.f32 %v758, %v800
        %v811 = vadd.f32 %v759, %v793
        %v812 = vadd.f32 %v760, %v801
        %v813 = vadd.f32 %v761, %v797
        %814 = vset.pattern.permute.xlu0 6
        %815 = vperm.xlu0 %814, %v524
        %v816 = vpop.permute.xlu0 %815
        %818 = vset.pattern.permute.xlu0 6
        %819 = vperm.xlu0 %818, %v525
        %v820 = vpop.permute.xlu0 %819
        %822 = vset.pattern.permute.xlu0 6
        %823 = vperm.xlu0 %822, %v526
        %v824 = vpop.permute.xlu0 %823
        %v826 = vmul.f32 %v518, %v816
        %v827 = vmul.f32 %v519, %v816
        %v828 = vmul.f32 %v520, %v820
        %v829 = vmul.f32 %v521, %v820
        %v830 = vmul.f32 %v522, %v824
        %v831 = vmul.f32 %v523, %v824
        %838 = vrot.lane.b32.xlu0 %v826, 92
        %v839 = vpop.permute.xlu0 %838
        %840 = vrot.lane.b32.xlu0 %v827, 92
        %v841 = vpop.permute.xlu0 %840
        %842 = vrot.lane.b32.xlu0 %v828, 92
        %v843 = vpop.permute.xlu0 %842
        %844 = vrot.lane.b32.xlu0 %v829, 92
        %v845 = vpop.permute.xlu0 %844
        %846 = vrot.lane.b32.xlu0 %v830, 92
        %v847 = vpop.permute.xlu0 %846
        %848 = vrot.lane.b32.xlu0 %v831, 92
        %v849 = vpop.permute.xlu0 %848
        %vm850 = vcmask 752640
        %v851 = vsel %vm850, %v839, %v841
        %v852 = vsel %vm850, %v843, %v845
        %v853 = vsel %vm850, %v847, %v849
        %v860 = vadd.f32 %v808, %v851
        %v861 = vadd.f32 %v809, %v841
        %v862 = vadd.f32 %v810, %v852
        %v863 = vadd.f32 %v811, %v845
        %v864 = vadd.f32 %v812, %v853
        %v865 = vadd.f32 %v813, %v849
        %866 = vset.pattern.permute.xlu0 7
        %867 = vperm.xlu0 %866, %v524
        %v868 = vpop.permute.xlu0 %867
        %870 = vset.pattern.permute.xlu0 7
        %871 = vperm.xlu0 %870, %v525
        %v872 = vpop.permute.xlu0 %871
        %874 = vset.pattern.permute.xlu0 7
        %875 = vperm.xlu0 %874, %v526
        %v876 = vpop.permute.xlu0 %875
        %v878 = vmul.f32 %v518, %v868
        %v879 = vmul.f32 %v519, %v868
        %v880 = vmul.f32 %v520, %v872
        %v881 = vmul.f32 %v521, %v872
        %v882 = vmul.f32 %v522, %v876
        %v883 = vmul.f32 %v523, %v876
        %890 = vrot.lane.b32.xlu0 %v878, 91
        %v891 = vpop.permute.xlu0 %890
        %892 = vrot.lane.b32.xlu0 %v879, 91
        %v893 = vpop.permute.xlu0 %892
        %894 = vrot.lane.b32.xlu0 %v880, 91
        %v895 = vpop.permute.xlu0 %894
        %896 = vrot.lane.b32.xlu0 %v881, 91
        %v897 = vpop.permute.xlu0 %896
        %898 = vrot.lane.b32.xlu0 %v882, 91
        %v899 = vpop.permute.xlu0 %898
        %900 = vrot.lane.b32.xlu0 %v883, 91
        %v901 = vpop.permute.xlu0 %900
        %vm902 = vcmask 744448
        %v903 = vsel %vm902, %v891, %v893
        %v904 = vsel %vm902, %v895, %v897
        %v905 = vsel %vm902, %v899, %v901
        %v912 = vadd.f32 %v860, %v903
        %v913 = vadd.f32 %v861, %v893
        %v914 = vadd.f32 %v862, %v904
        %v915 = vadd.f32 %v863, %v897
        %v916 = vadd.f32 %v864, %v905
        %v917 = vadd.f32 %v865, %v901
        %918 = vset.pattern.permute.xlu0 8
        %919 = vperm.xlu0 %918, %v524
        %v920 = vpop.permute.xlu0 %919
        %922 = vset.pattern.permute.xlu0 8
        %923 = vperm.xlu0 %922, %v525
        %v924 = vpop.permute.xlu0 %923
        %926 = vset.pattern.permute.xlu0 8
        %927 = vperm.xlu0 %926, %v526
        %v928 = vpop.permute.xlu0 %927
        %v930 = vmul.f32 %v518, %v920
        %v931 = vmul.f32 %v519, %v920
        %v932 = vmul.f32 %v520, %v924
        %v933 = vmul.f32 %v521, %v924
        %v934 = vmul.f32 %v522, %v928
        %v935 = vmul.f32 %v523, %v928
        %942 = vrot.lane.b32.xlu0 %v930, 90
        %v943 = vpop.permute.xlu0 %942
        %944 = vrot.lane.b32.xlu0 %v931, 90
        %v945 = vpop.permute.xlu0 %944
        %946 = vrot.lane.b32.xlu0 %v932, 90
        %v947 = vpop.permute.xlu0 %946
        %948 = vrot.lane.b32.xlu0 %v933, 90
        %v949 = vpop.permute.xlu0 %948
        %950 = vrot.lane.b32.xlu0 %v934, 90
        %v951 = vpop.permute.xlu0 %950
        %952 = vrot.lane.b32.xlu0 %v935, 90
        %v953 = vpop.permute.xlu0 %952
        %vm954 = vcmask 736256
        %v955 = vsel %vm954, %v943, %v945
        %v956 = vsel %vm954, %v947, %v949
        %v957 = vsel %vm954, %v951, %v953
        %v964 = vadd.f32 %v912, %v955
        %v965 = vadd.f32 %v913, %v945
        %v966 = vadd.f32 %v914, %v956
        %v967 = vadd.f32 %v915, %v949
        %v968 = vadd.f32 %v916, %v957
        %v969 = vadd.f32 %v917, %v953
        %v970 = vld [vmem:[%s5] sm:$0xff]
        %v971 = vld [vmem:[%s5 + $0x8] sm:$0xff]
        %v972 = vld [vmem:[%s5 + $0x10] sm:$0xff]
        %974 = vset.pattern.permute.xlu0 0
        %975 = vperm.xlu0 %974, %v970
        %v976 = vpop.permute.xlu0 %975
        %979 = vset.pattern.permute.xlu0 0
        %980 = vperm.xlu0 %979, %v971
        %v981 = vpop.permute.xlu0 %980
        %984 = vset.pattern.permute.xlu0 0
        %985 = vperm.xlu0 %984, %v972
        %v986 = vpop.permute.xlu0 %985
        %v988 = vadd.f32 %v964, %v976
        %v989 = vadd.f32 %v965, %v976
        %v990 = vadd.f32 %v966, %v981
        %v991 = vadd.f32 %v967, %v981
        %v992 = vadd.f32 %v968, %v986
        %v993 = vadd.f32 %v969, %v986
        %v994 = vmax.f32 %v988, 0.0
        %v995 = vmax.f32 %v989, 0.0
        %v996 = vmax.f32 %v990, 0.0
        %v997 = vmax.f32 %v991, 0.0
        %v998 = vmax.f32 %v992, 0.0
        %v999 = vmax.f32 %v993, 0.0
        %v1000 = vmin.f32 %v994, 6.0
        %v1001 = vmin.f32 %v995, 6.0
        %v1002 = vmin.f32 %v996, 6.0
        %v1003 = vmin.f32 %v997, 6.0
        %v1004 = vmin.f32 %v998, 6.0
        %v1005 = vmin.f32 %v999, 6.0
        %v1006 = vld [vmem:[%s6] sm:$0xf]
        %v1007 = vld [vmem:[%s7] sm:$0xf]
        %1009 = vset.pattern.permute.xlu0 0
        %1010 = vperm.xlu0 %1009, %v1007
        %v1011 = vpop.permute.xlu0 %1010
        %vm1013 = vcmask 195584
        %v1015 = vsel %vm1013, %v1006, 0
        %1017 = vmatpush.msra.mxu0 0.0
        %1018 = vmatpush.msra.mxu0 0.0
        %1019 = vmatpush.msra.mxu0 0.0
        %1020 = vmatpush.msra.mxu0 0.0
        %1021 = vmatpush.msra.mxu0 0.0
        %1022 = vmatpush.msra.mxu0 0.0
        %1023 = vmatpush.msra.mxu0 0.0
        %1024 = vmatpush.msra.mxu0 0.0
        %1025 = vmatpush.msra.mxu0 0.0
        %1026 = vmatpush.msra.mxu0 0.0
        %1027 = vmatpush.msra.mxu0 0.0
        %1028 = vmatpush.msra.mxu0 0.0
        %1029 = vmatpush.msra.mxu0 0.0
        %1030 = vmatpush.msra.mxu0 %v1004
        %1031 = vmatpush.msra.mxu0 %v1002
        %1032 = vmatpush.msra.mxu0 %v1000
        %1033 = vmatmul.f32.gmra.mxu0 %v1015
        %v1034 = vpop.f32.mrf.mxu0
        %v1035 = vadd.f32 %v1011, %v1034
        %1036 = vdwg.mxu0
        %1037 = vmatpush.msra.mxu0 0.0
        %1038 = vmatpush.msra.mxu0 0.0
        %1039 = vmatpush.msra.mxu0 0.0
        %1040 = vmatpush.msra.mxu0 0.0
        %1041 = vmatpush.msra.mxu0 0.0
        %1042 = vmatpush.msra.mxu0 0.0
        %1043 = vmatpush.msra.mxu0 0.0
        %1044 = vmatpush.msra.mxu0 0.0
        %1045 = vmatpush.msra.mxu0 0.0
        %1046 = vmatpush.msra.mxu0 0.0
        %1047 = vmatpush.msra.mxu0 0.0
        %1048 = vmatpush.msra.mxu0 0.0
        %1049 = vmatpush.msra.mxu0 0.0
        %1050 = vmatpush.msra.mxu0 %v1005
        %1051 = vmatpush.msra.mxu0 %v1003
        %1052 = vmatpush.msra.mxu0 %v1001
        %1053 = vmatmul.f32.gmra.mxu0 %v1015
        %v1054 = vpop.f32.mrf.mxu0
        %v1055 = vadd.f32 %v1011, %v1054
        %1056 = vdwg.mxu0
        %1058 = vrot.lane.b32.xlu0 %v1035, 126
        %v1059 = vpop.permute.xlu0 %1058
        %1061 = vrot.lane.b32.xlu0 %v1035, 124
        %v1062 = vpop.permute.xlu0 %1061
        %1064 = vrot.lane.b32.xlu0 %v1035, 122
        %v1065 = vpop.permute.xlu0 %1064
        %1067 = vrot.lane.b32.xlu0 %v1035, 120
        %v1068 = vpop.permute.xlu0 %1067
        %1070 = vrot.lane.b32.xlu0 %v1035, 118
        %v1071 = vpop.permute.xlu0 %1070
        %1073 = vrot.lane.b32.xlu0 %v1035, 116
        %v1074 = vpop.permute.xlu0 %1073
        %1077 = vrot.lane.b32.xlu0 %v1035, 114
        %v1078 = vpop.permute.xlu0 %1077
        %1079 = vrot.lane.b32.xlu0 %v1055, 114
        %v1080 = vpop.permute.xlu0 %1079
        %vm1081 = vcmask 932864
        %v1082 = vsel %vm1081, %v1078, %v1080
        %vm1084 = vcmask 130048
        %v1085 = vsel %vm1084, %v1035, %v1059
        %vm1086 = vcmask 261120
        %v1087 = vsel %vm1086, %v1085, %v1062
        %vm1088 = vcmask 392192
        %v1089 = vsel %vm1088, %v1087, %v1065
        %vm1090 = vcmask 523264
        %v1091 = vsel %vm1090, %v1089, %v1068
        %vm1092 = vcmask 654336
        %v1093 = vsel %vm1092, %v1091, %v1071
        %vm1094 = vcmask 785408
        %v1095 = vsel %vm1094, %v1093, %v1074
        %vm1096 = vcmask 916480
        %v1097 = vsel %vm1096, %v1095, %v1082
        %v1098 = vld [vmem:[%s406] sm:$0xf]
        %v1099 = vadd.f32 %v1097, %v1098
        %1100 = vst [vmem:[%s385] sm:$0xf] %v1099
        %s1101 = sand.u32 %s253, 1
        %s1102 = scalar_lea.sflag [#allocation3], %s1101
        %s1103 = sand.u32 %s253, 1
        %s1104 = smul.addr %s1103, 4
        %s1105 = scalar_lea.vmem [#allocation2], %s1104
        // Predicated region
        $region57: #{tpu_custom_call.1} parent=55 // pred_check
          %p1106 = pneg %p263
        $region58: #{tpu_custom_call.1} parent=55 // pred_check_branch
          %1108 = sbr.rel (%p1106) target = $region60
        $region59: #{tpu_custom_call.1} parent=55 // pred_region
          %1110 = vsyncadd %s1102, 0
          %s1111 = smul.addr %s27, 2
          %s1112 = sadd.s32 %s28, %s1111
          %s1113 = smul.addr %s1112, 4
          %s1114 = scalar_lea.hbm %s9, %s1113
          %s1116 = sshll.u32 %s1105, 4
          %s1117 = int_to_ptr.vmem [resolvable:$true] %s1116
          %s1118 = sshll.u32 %s1114, 4
          %s1119 = int_to_ptr.hbm [resolvable:$true] %s1118
          %1121 = dma.vmem_to_hbm [thread:$0]  %s1117, 64, %s1119, %s1102
        $region60: #{tpu_custom_call.1} parent=55 // pred_fallthru
          _
      $region56: #{tpu_custom_call.1} parent=5 // pred_fallthru
        _
      %p1122 = scmp.le.s32.totalorder 2, %s18
      // Predicated region
      $region61: #{tpu_custom_call.1} parent=5 // pred_check
        %p1123 = pneg %p1122
      $region62: #{tpu_custom_call.1} parent=5 // pred_check_branch
        %1125 = sbr.rel (%p1123) target = $region64
      $region63: #{tpu_custom_call.1} parent=5 // pred_region
        %s1126 = ssub.s32 %s18, 2
        // Predicated region
        $region65: #{tpu_custom_call.1} parent=63 // pred_check
          %p1127 = pneg %p269
        $region66: #{tpu_custom_call.1} parent=63 // pred_check_branch
          %1129 = sbr.rel (%p1127) target = $region68
        $region67: #{tpu_custom_call.1} parent=63 // pred_region
          %s1130 = sand.u32 %s254, 1
          %s1131 = scalar_lea.sflag [#allocation3], %s1130
          %s1132 = sand.u32 %s254, 1
          %s1133 = smul.addr %s1132, 4
          %s1134 = scalar_lea.vmem [#allocation2], %s1133
          %1136 = dma.done %s1131, 64
        $region68: #{tpu_custom_call.1} parent=63 // pred_fallthru
          _
      $region64: #{tpu_custom_call.1} parent=5 // pred_fallthru
        _
    $region6: #{tpu_custom_call.1} parent=1 // loop_footer
      %s22 = sadd.s32 1, %s18
    $region7: #{tpu_custom_call.1} parent=1 // loop_footer_branch
      %17 = sbr.rel target = $region3
    $region8: #{tpu_custom_call.1} parent=1 // loop_exit
      _
    %1137 = vsyncpa [#allocation3], 1
    %s1138 = scalar_lea.sflag [#allocation3], 1
    %1139 = vsyncpa %s1138, 1

</llo_original>
